<compile_context>
chip_gen: v5e
topology: v5e:2x2
jax: 0.10.0
libtpu: 0.0.40
codegen_flags: <defaults>
</compile_context>

<pallas_src>
import functools

import jax
import jax.numpy as jnp
from jax import lax
from jax.experimental import pallas as pl
from jax.experimental.pallas import tpu as pltpu


def _round_up(a, b):
    return (a + b - 1) // b * b


def _vmem_budget_bytes():
    """~75% of physical per-core VMEM (≈48 MiB v7x, ≈96 MiB v5e/v6e)."""
    cap = None
    try:
        cap = getattr(pltpu.get_tpu_info(), "vmem_capacity_bytes", None)
    except Exception:
        cap = None
    if not cap:
        cap = 64 * 1024 * 1024          # v7x-sized fallback: safe on every generation
    return int(cap) * 3 // 4


def _pick_hidden_tile(H, want):
    """Largest multiple of 128 that divides H and is <= want (bounded fallback)."""
    want = max(1, min(want, H))
    if H % 128 == 0:
        th = max((want // 128) * 128, 128)
        while H % th != 0:
            th -= 128
        return th
    for th in range(want, 0, -1):       # rare: H not a multiple of 128
        if H % th == 0:
            return th
    return H


def _vmem_resident_est(tm, D, H, th, wbytes):
    weights = 2 * 2 * D * H * wbytes            # w1 + w2, double-buffered allocation
    io = 2 * 2 * tm * D * 4                     # x + out tiles, f32, double-buffered
    biases = 2 * (2 * H + 3 * D) * 4
    temps = 4 * tm * th * 4 + 2 * tm * D * 4    # hidden-chunk temporaries + epilogue
    return weights + io + biases + temps


def _vmem_streamed_est(tm, D, th, wbytes):
    weights = 2 * 2 * D * th * wbytes           # w1 / w2 hidden slices, double-buffered
    io = 2 * 2 * tm * D * 4
    scratch = tm * D * 4 + tm * D * 2           # f32 accumulator + bf16 x copy
    biases = 2 * (2 * th + 3 * D) * 4
    temps = 4 * tm * th * 4
    return weights + io + scratch + biases + temps


def _ffn_resident_kernel(x_ref, w1_ref, b1_ref, w2_ref, b2_ref, gamma_ref,
                         beta_ref, o_ref, *, th, n_chunks):
    # grid = (row_tiles,); full w1/w2 stay resident in VMEM for the whole call.
    x = x_ref[...]                                      # (TM, D), input dtype
    x_mm = x.astype(w1_ref.dtype)                       # cast once per row tile
    acc = jnp.zeros(x.shape, jnp.float32)
    for c in range(n_chunks):                           # static unroll over hidden chunks
        lo = c * th
        h = jnp.dot(x_mm, w1_ref[:, lo:lo + th],
                    preferred_element_type=jnp.float32)
        h = h + b1_ref[:, lo:lo + th]
        # Exact erf GELU (matches torch.nn.GELU default).
        h = 0.5 * h * (1.0 + lax.erf(h * 0.7071067811865476))
        acc = acc + jnp.dot(h.astype(w2_ref.dtype), w2_ref[lo:lo + th, :],
                            preferred_element_type=jnp.float32)
    y = acc + b2_ref[...] + x.astype(jnp.float32)       # residual in f32
    mean = jnp.mean(y, axis=-1, keepdims=True)
    centered = y - mean
    var = jnp.mean(centered * centered, axis=-1, keepdims=True)
    out = centered * lax.rsqrt(var + 1e-5) * gamma_ref[...] + beta_ref[...]
    o_ref[...] = out.astype(o_ref.dtype)


def _ffn_streamed_kernel(x_ref, w1_ref, b1_ref, w2_ref, b2_ref, gamma_ref,
                         beta_ref, o_ref, acc_ref, xbf_ref):
    # grid = (row_tiles, hidden_tiles); hidden axis is the reduction.
    k = pl.program_id(1)

    @pl.when(k == 0)
    def _init():
        acc_ref[...] = jnp.zeros_like(acc_ref)
        xbf_ref[...] = x_ref[...].astype(xbf_ref.dtype)    # hoisted cast (once per row tile)

    h = jnp.dot(xbf_ref[...], w1_ref[...], preferred_element_type=jnp.float32)
    h = h + b1_ref[...]
    h = 0.5 * h * (1.0 + lax.erf(h * 0.7071067811865476))
    acc_ref[...] += jnp.dot(h.astype(w2_ref.dtype), w2_ref[...],
                            preferred_element_type=jnp.float32)

    @pl.when(k == pl.num_programs(1) - 1)
    def _epilogue():
        y = acc_ref[...] + b2_ref[...] + x_ref[...].astype(jnp.float32)
        mean = jnp.mean(y, axis=-1, keepdims=True)
        centered = y - mean
        var = jnp.mean(centered * centered, axis=-1, keepdims=True)
        out = centered * lax.rsqrt(var + 1e-5) * gamma_ref[...] + beta_ref[...]
        o_ref[...] = out.astype(o_ref.dtype)


def poswise_ffn(x, w1, b1, w2, b2, gamma, beta, *,
                tile_rows=None, tile_hidden=512, resident=None,
                weight_dtype=jnp.bfloat16):
    """x: [B, S, D]. Returns LayerNorm(x + Linear2(GELU(Linear1(x))))."""
    B, S, D = x.shape
    H = w1.shape[1]                     # 4 * D
    rows = B * S
    rows8 = _round_up(rows, 8)
    wbytes = jnp.dtype(weight_dtype).itemsize
    budget = _vmem_budget_bytes()

    th = _pick_hidden_tile(H, tile_hidden)

    def clamp_tm(t):
        return max(8, min(_round_up(t, 8), rows8))

    # Resident-weight path whenever the full bf16 w1/w2 (plus working set) fit the budget.
    tm = clamp_tm(tile_rows if tile_rows is not None else 512)
    if resident is None:
        use_resident = _vmem_resident_est(tm, D, H, th, wbytes) <= budget
    else:
        use_resident = bool(resident)

    if not use_resident:
        # Streamed path: large row tiles to clear the flops/byte roofline knee
        # (~TM 240 on v5e, ~655 on v6e, ~310 on v7x); shrink only if VMEM-bound.
        tm = clamp_tm(tile_rows if tile_rows is not None else 1024)
        while tm > 8 and _vmem_streamed_est(tm, D, th, wbytes) > budget:
            tm = clamp_tm(tm // 2)
        while (th > 128 and H % 128 == 0
               and _vmem_streamed_est(tm, D, th, wbytes) > budget):
            new_th = th - 128
            while new_th > 0 and H % new_th != 0:
                new_th -= 128
            if new_th <= 0:
                break
            th = new_th

    rows_p = _round_up(rows, tm)
    n_row_tiles = rows_p // tm

    x2 = x.reshape(rows, D)
    if rows_p != rows:
        x2 = jnp.pad(x2, ((0, rows_p - rows), (0, 0)))

    w1c = w1.astype(weight_dtype)
    w2c = w2.astype(weight_dtype)
    b1_2 = b1.reshape(1, H).astype(jnp.float32)
    b2_2 = b2.reshape(1, D).astype(jnp.float32)
    gamma_2 = gamma.reshape(1, D).astype(jnp.float32)
    beta_2 = beta.reshape(1, D).astype(jnp.float32)

    weight_bytes = (w1.size + w2.size) * wbytes
    cost = pl.CostEstimate(
        flops=4 * rows_p * D * H,                       # two matmuls
        transcendentals=rows_p * H,                     # erf
        bytes_accessed=(2 * rows_p * D) * 4             # x in + out
                       + weight_bytes * (1 if use_resident else n_row_tiles)
                       + (b1.size + b2.size + gamma.size + beta.size) * 4,
    )

    if use_resident:
        out = pl.pallas_call(
            functools.partial(_ffn_resident_kernel, th=th, n_chunks=H // th),
            out_shape=jax.ShapeDtypeStruct((rows_p, D), x.dtype),
            grid=(n_row_tiles,),
            in_specs=[
                pl.BlockSpec((tm, D), lambda i: (i, 0)),    # x rows
                pl.BlockSpec((D, H), lambda i: (0, 0)),     # whole w1, fetched once
                pl.BlockSpec((1, H), lambda i: (0, 0)),     # b1
                pl.BlockSpec((H, D), lambda i: (0, 0)),     # whole w2, fetched once
                pl.BlockSpec((1, D), lambda i: (0, 0)),     # b2
                pl.BlockSpec((1, D), lambda i: (0, 0)),     # gamma
                pl.BlockSpec((1, D), lambda i: (0, 0)),     # beta
            ],
            out_specs=pl.BlockSpec((tm, D), lambda i: (i, 0)),
            compiler_params=pltpu.CompilerParams(
                # TODO(synk): on v7x switch the row axis to CORE_PARALLEL / core_map to
                # guarantee the 2 TensorCores split the row tiles.
                dimension_semantics=("parallel",),
                vmem_limit_bytes=budget,
            ),
            cost_estimate=cost,
        )(x2, w1c, b1_2, w2c, b2_2, gamma_2, beta_2)
    else:
        out = pl.pallas_call(
            _ffn_streamed_kernel,
            out_shape=jax.ShapeDtypeStruct((rows_p, D), x.dtype),
            grid=(n_row_tiles, H // th),
            in_specs=[
                pl.BlockSpec((tm, D), lambda i, k: (i, 0)),   # x rows (const over k)
                pl.BlockSpec((D, th), lambda i, k: (0, k)),   # w1 hidden slice
                pl.BlockSpec((1, th), lambda i, k: (0, k)),   # b1 hidden slice
                pl.BlockSpec((th, D), lambda i, k: (k, 0)),   # w2 hidden slice
                pl.BlockSpec((1, D), lambda i, k: (0, 0)),    # b2
                pl.BlockSpec((1, D), lambda i, k: (0, 0)),    # gamma
                pl.BlockSpec((1, D), lambda i, k: (0, 0)),    # beta
            ],
            out_specs=pl.BlockSpec((tm, D), lambda i, k: (i, 0)),
            scratch_shapes=[pltpu.VMEM((tm, D), jnp.float32),   # f32 accumulator
                            pltpu.VMEM((tm, D), weight_dtype)], # hoisted bf16 x
            compiler_params=pltpu.CompilerParams(
                dimension_semantics=("parallel", "arbitrary"),
                vmem_limit_bytes=budget,
            ),
            cost_estimate=cost,
        )(x2, w1c, b1_2, w2c, b2_2, gamma_2, beta_2)

    return out[:rows].reshape(B, S, D)


def _reference(x, w1, b1, w2, b2, gamma, beta, weight_dtype=jnp.bfloat16):
    # Mirrors the kernel's bf16-weight / f32-accumulate arithmetic.
    B, S, D = x.shape
    x2 = x.reshape(-1, D)
    h = jnp.dot(x2.astype(weight_dtype), w1.astype(weight_dtype),
                preferred_element_type=jnp.float32) + b1
    h = jax.nn.gelu(h, approximate=False)
    y = jnp.dot(h.astype(weight_dtype), w2.astype(weight_dtype),
                preferred_element_type=jnp.float32) + b2 + x2
    mean = jnp.mean(y, axis=-1, keepdims=True)
    var = jnp.mean((y - mean) ** 2, axis=-1, keepdims=True)
    out = (y - mean) / jnp.sqrt(var + 1e-5) * gamma + beta
    return out.reshape(B, S, D)


def _make_params(key, D):
    H = 4 * D
    k1, k2, k3, k4 = jax.random.split(key, 4)
    lim1 = 1.0 / jnp.sqrt(D)
    lim2 = 1.0 / jnp.sqrt(H)
    w1 = jax.random.uniform(k1, (D, H), minval=-lim1, maxval=lim1, dtype=jnp.float32)
    b1 = jax.random.uniform(k2, (H,), minval=-lim1, maxval=lim1, dtype=jnp.float32)
    w2 = jax.random.uniform(k3, (H, D), minval=-lim2, maxval=lim2, dtype=jnp.float32)
    b2 = jax.random.uniform(k4, (D,), minval=-lim2, maxval=lim2, dtype=jnp.float32)
    gamma = jnp.ones((D,), dtype=jnp.float32)
    beta = jnp.zeros((D,), dtype=jnp.float32)
    return w1, b1, w2, b2, gamma, beta


if __name__ == "__main__":
    key = jax.random.PRNGKey(0)
    k_a, k_b, k_c, kp_a, kp_b, kp_c = jax.random.split(key, 6)

    # Test 1: module-native small shape (batch=2, seq=8, d_model=32, hidden=128).
    # Weights trivially fit -> resident-weight path.
    B, S, D = 2, 8, 32
    x = jax.random.normal(k_a, (B, S, D), dtype=jnp.float32)
    params = _make_params(kp_a, D)
    out = jax.block_until_ready(poswise_ffn(x, *params))
    ref = _reference(x, *params)
    assert out.shape == (B, S, D)
    assert jnp.allclose(out, ref, atol=2e-3, rtol=2e-3), "mismatch (test 1, resident)"

    # Test 2: forces the streamed (hidden-reduction grid) path + row padding (rows=10),
    # H=512 split into two 256-wide weight slices with accumulator + pl.when epilogue.
    B2, S2, D2 = 2, 5, 128
    x2 = jax.random.normal(k_b, (B2, S2, D2), dtype=jnp.float32)
    params2 = _make_params(kp_b, D2)
    out2 = jax.block_until_ready(
        poswise_ffn(x2, *params2, resident=False, tile_hidden=256))
    ref2 = _reference(x2, *params2)
    assert out2.shape == (B2, S2, D2)
    assert jnp.allclose(out2, ref2, atol=2e-3, rtol=2e-3), "mismatch (test 2, streamed)"

    # Test 3: resident path with multiple in-kernel hidden chunks (H=512, th=128 -> 4).
    B3, S3, D3 = 2, 8, 128
    x3 = jax.random.normal(k_c, (B3, S3, D3), dtype=jnp.float32)
    params3 = _make_params(kp_c, D3)
    out3 = jax.block_until_ready(
        poswise_ffn(x3, *params3, resident=True, tile_hidden=128))
    ref3 = _reference(x3, *params3)
    assert out3.shape == (B3, S3, D3)
    assert jnp.allclose(out3, ref3, atol=2e-3, rtol=2e-3), "mismatch (test 3, chunked resident)"

    print("KERNEL_OK")
</pallas_src>

<mosaic_0001>
module attributes {stable_mosaic.version = 11 : i64} {
  func.func @_ffn_resident_kernel(%arg0: i32, %arg1: memref<16x32xf32, #tpu.memory_space<vmem>>, %arg2: memref<32x128xbf16, #tpu.memory_space<vmem>>, %arg3: memref<1x128xf32, #tpu.memory_space<vmem>>, %arg4: memref<128x32xbf16, #tpu.memory_space<vmem>>, %arg5: memref<1x32xf32, #tpu.memory_space<vmem>>, %arg6: memref<1x32xf32, #tpu.memory_space<vmem>>, %arg7: memref<1x32xf32, #tpu.memory_space<vmem>>, %arg8: memref<16x32xf32, #tpu.memory_space<vmem>>) attributes {dimension_semantics = [#tpu.dimension_semantics<parallel>], iteration_bounds = array<i64: 1>, scalar_prefetch = 0 : i64, scratch_operands = 0 : i64, tpu.core_type = #tpu.core_type<tc>, window_params = [{transform_indices = @transform_0, window_bounds = array<i64: 16, 32>}, {pipeline_mode = #tpu.pipeline_mode<synchronous>, transform_indices = @transform_1, window_bounds = array<i64: 32, 128>}, {pipeline_mode = #tpu.pipeline_mode<synchronous>, transform_indices = @transform_2, window_bounds = array<i64: 1, 128>}, {pipeline_mode = #tpu.pipeline_mode<synchronous>, transform_indices = @transform_3, window_bounds = array<i64: 128, 32>}, {pipeline_mode = #tpu.pipeline_mode<synchronous>, transform_indices = @transform_4, window_bounds = array<i64: 1, 32>}, {pipeline_mode = #tpu.pipeline_mode<synchronous>, transform_indices = @transform_5, window_bounds = array<i64: 1, 32>}, {pipeline_mode = #tpu.pipeline_mode<synchronous>, transform_indices = @transform_6, window_bounds = array<i64: 1, 32>}, {transform_indices = @transform_7, window_bounds = array<i64: 16, 32>}]} {
    %c0 = arith.constant 0 : index
    %c0_0 = arith.constant 0 : index
    %0 = vector.load %arg1[%c0, %c0_0] : memref<16x32xf32, #tpu.memory_space<vmem>>, vector<16x32xf32>
    %1 = arith.truncf %0 : vector<16x32xf32> to vector<16x32xbf16>
    %cst = arith.constant 0.000000e+00 : f32
    %2 = vector.broadcast %cst : f32 to vector<16x32xf32>
    %c0_1 = arith.constant 0 : index
    %c0_2 = arith.constant 0 : index
    %3 = vector.load %arg2[%c0_1, %c0_2] : memref<32x128xbf16, #tpu.memory_space<vmem>>, vector<32x128xbf16>
    %cst_3 = arith.constant dense<0.000000e+00> : vector<16x128xf32>
    %4 = tpu.matmul %1, %3, %cst_3 {dimension_numbers = #tpu.dot_dimension_numbers<[1], [0], [0], [1], [0, 0, 1, 1], [], []>} : vector<16x32xbf16>, vector<32x128xbf16>, vector<16x128xf32> -> vector<16x128xf32>
    %c0_4 = arith.constant 0 : index
    %c0_5 = arith.constant 0 : index
    %5 = vector.load %arg3[%c0_4, %c0_5] : memref<1x128xf32, #tpu.memory_space<vmem>>, vector<1x128xf32>
    %6 = vector.broadcast %5 : vector<1x128xf32> to vector<16x128xf32>
    %7 = arith.addf %4, %6 : vector<16x128xf32>
    %cst_6 = arith.constant 5.000000e-01 : f32
    %8 = vector.broadcast %cst_6 : f32 to vector<16x128xf32>
    %9 = arith.mulf %8, %7 : vector<16x128xf32>
    %cst_7 = arith.constant 0.707106769 : f32
    %10 = vector.broadcast %cst_7 : f32 to vector<16x128xf32>
    %11 = arith.mulf %7, %10 : vector<16x128xf32>
    %12 = math.erf %11 : vector<16x128xf32>
    %cst_8 = arith.constant 1.000000e+00 : f32
    %13 = vector.broadcast %cst_8 : f32 to vector<16x128xf32>
    %14 = arith.addf %13, %12 : vector<16x128xf32>
    %15 = arith.mulf %9, %14 : vector<16x128xf32>
    %16 = arith.truncf %15 : vector<16x128xf32> to vector<16x128xbf16>
    %c0_9 = arith.constant 0 : index
    %c0_10 = arith.constant 0 : index
    %17 = vector.load %arg4[%c0_9, %c0_10] : memref<128x32xbf16, #tpu.memory_space<vmem>>, vector<128x32xbf16>
    %cst_11 = arith.constant dense<0.000000e+00> : vector<16x32xf32>
    %18 = tpu.matmul %16, %17, %cst_11 {dimension_numbers = #tpu.dot_dimension_numbers<[1], [0], [0], [1], [0, 0, 1, 1], [], []>} : vector<16x128xbf16>, vector<128x32xbf16>, vector<16x32xf32> -> vector<16x32xf32>
    %19 = arith.addf %2, %18 : vector<16x32xf32>
    %c0_12 = arith.constant 0 : index
    %c0_13 = arith.constant 0 : index
    %20 = vector.load %arg5[%c0_12, %c0_13] : memref<1x32xf32, #tpu.memory_space<vmem>>, vector<1x32xf32>
    %21 = vector.broadcast %20 : vector<1x32xf32> to vector<16x32xf32>
    %22 = arith.addf %19, %21 : vector<16x32xf32>
    %23 = arith.addf %22, %0 : vector<16x32xf32>
    %cst_14 = arith.constant dense<0.000000e+00> : vector<16xf32>
    %24 = vector.multi_reduction <add>, %23, %cst_14 [1] : vector<16x32xf32> to vector<16xf32>
    %25 = vector.shape_cast %24 : vector<16xf32> to vector<16x1xf32>
    %cst_15 = arith.constant 3.200000e+01 : f32
    %26 = vector.broadcast %cst_15 : f32 to vector<16x1xf32>
    %27 = arith.divf %25, %26 : vector<16x1xf32>
    %28 = vector.broadcast %27 : vector<16x1xf32> to vector<16x32xf32>
    %29 = arith.subf %23, %28 : vector<16x32xf32>
    %30 = arith.mulf %29, %29 : vector<16x32xf32>
    %cst_16 = arith.constant dense<0.000000e+00> : vector<16xf32>
    %31 = vector.multi_reduction <add>, %30, %cst_16 [1] : vector<16x32xf32> to vector<16xf32>
    %32 = vector.shape_cast %31 : vector<16xf32> to vector<16x1xf32>
    %cst_17 = arith.constant 3.200000e+01 : f32
    %33 = vector.broadcast %cst_17 : f32 to vector<16x1xf32>
    %34 = arith.divf %32, %33 : vector<16x1xf32>
    %cst_18 = arith.constant 9.99999974E-6 : f32
    %35 = vector.broadcast %cst_18 : f32 to vector<16x1xf32>
    %36 = arith.addf %34, %35 : vector<16x1xf32>
    %37 = math.rsqrt %36 : vector<16x1xf32>
    %38 = vector.broadcast %37 : vector<16x1xf32> to vector<16x32xf32>
    %39 = arith.mulf %29, %38 : vector<16x32xf32>
    %c0_19 = arith.constant 0 : index
    %c0_20 = arith.constant 0 : index
    %40 = vector.load %arg6[%c0_19, %c0_20] : memref<1x32xf32, #tpu.memory_space<vmem>>, vector<1x32xf32>
    %41 = vector.broadcast %40 : vector<1x32xf32> to vector<16x32xf32>
    %42 = arith.mulf %39, %41 : vector<16x32xf32>
    %c0_21 = arith.constant 0 : index
    %c0_22 = arith.constant 0 : index
    %43 = vector.load %arg7[%c0_21, %c0_22] : memref<1x32xf32, #tpu.memory_space<vmem>>, vector<1x32xf32>
    %44 = vector.broadcast %43 : vector<1x32xf32> to vector<16x32xf32>
    %45 = arith.addf %42, %44 : vector<16x32xf32>
    %c0_23 = arith.constant 0 : index
    %c0_24 = arith.constant 0 : index
    %46 = vector.load %arg8[%c0_23, %c0_24] : memref<16x32xf32, #tpu.memory_space<vmem>>, vector<16x32xf32>
    tpu.vector_store %arg8[%c0_23, %c0_24], %45 {strides = array<i32>} : memref<16x32xf32, #tpu.memory_space<vmem>>, vector<16x32xf32>,
    return
  }
  func.func @transform_0(%arg0: i32) -> (i32, i32) {
    %c0_i32 = arith.constant 0 : i32
    %c0_i32_0 = arith.constant 0 : i32
    return %arg0, %c0_i32 : i32, i32
  }
  func.func @transform_1(%arg0: i32) -> (i32, i32) {
    %c0_i32 = arith.constant 0 : i32
    %c0_i32_0 = arith.constant 0 : i32
    %c0_i32_1 = arith.constant 0 : i32
    return %c0_i32, %c0_i32_0 : i32, i32
  }
  func.func @transform_2(%arg0: i32) -> (i32, i32) {
    %c0_i32 = arith.constant 0 : i32
    %c0_i32_0 = arith.constant 0 : i32
    %c0_i32_1 = arith.constant 0 : i32
    return %c0_i32, %c0_i32_0 : i32, i32
  }
  func.func @transform_3(%arg0: i32) -> (i32, i32) {
    %c0_i32 = arith.constant 0 : i32
    %c0_i32_0 = arith.constant 0 : i32
    %c0_i32_1 = arith.constant 0 : i32
    return %c0_i32, %c0_i32_0 : i32, i32
  }
  func.func @transform_4(%arg0: i32) -> (i32, i32) {
    %c0_i32 = arith.constant 0 : i32
    %c0_i32_0 = arith.constant 0 : i32
    %c0_i32_1 = arith.constant 0 : i32
    return %c0_i32, %c0_i32_0 : i32, i32
  }
  func.func @transform_5(%arg0: i32) -> (i32, i32) {
    %c0_i32 = arith.constant 0 : i32
    %c0_i32_0 = arith.constant 0 : i32
    %c0_i32_1 = arith.constant 0 : i32
    return %c0_i32, %c0_i32_0 : i32, i32
  }
  func.func @transform_6(%arg0: i32) -> (i32, i32) {
    %c0_i32 = arith.constant 0 : i32
    %c0_i32_0 = arith.constant 0 : i32
    %c0_i32_1 = arith.constant 0 : i32
    return %c0_i32, %c0_i32_0 : i32, i32
  }
  func.func @transform_7(%arg0: i32) -> (i32, i32) {
    %c0_i32 = arith.constant 0 : i32
    %c0_i32_0 = arith.constant 0 : i32
    return %arg0, %c0_i32 : i32, i32
  }
}

</mosaic_0001>

<llo_original>
// kernel: tpu_custom_call.1
$region0: #{tpu_custom_call.1}
  #allocation0 [shape = 'u32[]', space=smem, size = 0x4, offset = 0x4, fixed_abs, tag = 'smem constant byte address 0x4 - core index']
  #allocation1 [shape = 'u32[72,128]{1,0:T(1,128)}', space=vmem, size = 0x9000, scoped, tag = 'internal scratch']
  %s0 = inlined_call_operand.vmem [shape: f32[16,32], index: 0, kind: input, shape index: {}]
  %s1 = inlined_call_operand.vmem [shape: bf16[32,128], index: 1, kind: input, shape index: {}]
  %s2 = inlined_call_operand.vmem [shape: f32[1,128], index: 2, kind: input, shape index: {}]
  %s3 = inlined_call_operand.vmem [shape: bf16[128,32], index: 3, kind: input, shape index: {}]
  %s4 = inlined_call_operand.vmem [shape: f32[1,32], index: 4, kind: input, shape index: {}]
  %s5 = inlined_call_operand.vmem [shape: f32[1,32], index: 5, kind: input, shape index: {}]
  %s6 = inlined_call_operand.vmem [shape: f32[1,32], index: 6, kind: input, shape index: {}]
  %s7 = inlined_call_operand.hbm [shape: f32[16,32], index: 7, kind: output, shape index: {}]
  %s8 = sld [smem:[#allocation0]]
  $region38: #{tpu_custom_call.1} parent=0
    _
  %s10 = ssub.s32 1, %s8
  %s11 = scalar_select 0, %s10, %s8
  $region1: #{tpu_custom_call.1} parent=0
    #allocation2 [shape = 'u8[8192]{0}', space=vmem, size = 0x2000, scoped, tag = 'output window, operand 0, single buffered']
    #allocation3 [shape = 's32[1]{0}', space=sflag, size = 0x4, scoped, tag = 'scoped memory for tpu_custom_call.1']
    %12 = vsyncpa [#allocation3], 0
    // Predicated region
    $region2: #{tpu_custom_call.1} parent=1 // pred_check
      _
    $region3: #{tpu_custom_call.1} parent=1 // pred_check_branch
      %14 = sbr.rel (0) target = $region5
    $region4: #{tpu_custom_call.1} parent=1 // pred_region
      _
    $region5: #{tpu_custom_call.1} parent=1 // pred_fallthru
      _
    // Predicated region
    $region6: #{tpu_custom_call.1} parent=1 // pred_check
      _
    $region7: #{tpu_custom_call.1} parent=1 // pred_check_branch
      %16 = sbr.rel (0) target = $region9
    $region8: #{tpu_custom_call.1} parent=1 // pred_region
      _
    $region9: #{tpu_custom_call.1} parent=1 // pred_fallthru
      _
    // Predicated region
    $region10: #{tpu_custom_call.1} parent=1 // pred_check
      _
    $region11: #{tpu_custom_call.1} parent=1 // pred_check_branch
      %18 = sbr.rel (0) target = $region13
    $region12: #{tpu_custom_call.1} parent=1 // pred_region
      _
    $region13: #{tpu_custom_call.1} parent=1 // pred_fallthru
      _
    // Predicated region
    $region14: #{tpu_custom_call.1} parent=1 // pred_check
      _
    $region15: #{tpu_custom_call.1} parent=1 // pred_check_branch
      %20 = sbr.rel (0) target = $region17
    $region16: #{tpu_custom_call.1} parent=1 // pred_region
      _
    $region17: #{tpu_custom_call.1} parent=1 // pred_fallthru
      _
    // Predicated region
    $region18: #{tpu_custom_call.1} parent=1 // pred_check
      _
    $region19: #{tpu_custom_call.1} parent=1 // pred_check_branch
      %22 = sbr.rel (0) target = $region21
    $region20: #{tpu_custom_call.1} parent=1 // pred_region
      _
    $region21: #{tpu_custom_call.1} parent=1 // pred_fallthru
      _
    // Predicated region
    $region22: #{tpu_custom_call.1} parent=1 // pred_check
      _
    $region23: #{tpu_custom_call.1} parent=1 // pred_check_branch
      %24 = sbr.rel (0) target = $region25
    $region24: #{tpu_custom_call.1} parent=1 // pred_region
      _
    $region25: #{tpu_custom_call.1} parent=1 // pred_fallthru
      _
    // Predicated region
    $region26: #{tpu_custom_call.1} parent=1 // pred_check
      _
    $region27: #{tpu_custom_call.1} parent=1 // pred_check_branch
      %26 = sbr.rel (0) target = $region29
    $region28: #{tpu_custom_call.1} parent=1 // pred_region
      _
    $region29: #{tpu_custom_call.1} parent=1 // pred_fallthru
      _
    %v28 = vld [vmem:[%s0] sm:$0xff]
    %v29 = vld [vmem:[%s0 + $0x8] sm:$0xff]
    %v30 = vpack.c.bf16 %v29, %v28
    %v31 = vld [vmem:[%s1] sm:$0xf]
    %v32 = vld [vmem:[%s1 + $0x4] sm:$0xf]
    %v33 = vld [vmem:[%s1 + $0x8] sm:$0xf]
    %v34 = vld [vmem:[%s1 + $0xc] sm:$0xf]
    %v35 = vld [vmem:[%s2] sm:$0x1]
    %v37 = vperm.slane %v35, 0
    %v43 = vunpack.c.l.b16 %v31
    %v44 = vunpack.c.l.b16 %v32
    %v45 = vunpack.c.l.b16 %v33
    %v46 = vunpack.c.l.b16 %v34
    %v47 = vpack.c.b16 %v44, %v43
    %v48 = vpack.c.b16 %v46, %v45
    %vm51 = vcmask 261120
    %v53 = vsel %vm51, %v30, 0
    %55 = vmatpush.bf16.msra.mxu0 0
    %56 = vmatpush.bf16.msra.mxu0 0
    %57 = vmatpush.bf16.msra.mxu0 0
    %58 = vmatpush.bf16.msra.mxu0 0
    %59 = vmatpush.bf16.msra.mxu0 0
    %60 = vmatpush.bf16.msra.mxu0 0
    %61 = vmatpush.bf16.msra.mxu0 %v48
    %62 = vmatpush.bf16.msra.mxu0 %v47
    %63 = vmatmul.bf16.gmra.mxu0 %v53
    %v64 = vpop.f32.mrf.mxu0
    %v65 = vadd.f32 %v37, %v64
    %v66 = vpop.f32.mrf.mxu0
    %v67 = vadd.f32 %v37, %v66
    %68 = vdwg.mxu0
    %v69 = vmul.f32 %v65, 0.5
    %v70 = vmul.f32 %v67, 0.5
    %v71 = vmul.f32 %v65, 0.70710677
    %v72 = vmul.f32 %v67, 0.70710677
    %v73 = vmul.f32 %v71, %v71
    %v74 = vmin.f32 16.0, %v73
    %v75 = vmul.f32 %v74, 2.1237322e-06
    %v76 = vadd.f32 %v75, 0.00028619796
    %v77 = vmul.f32 %v74, %v76
    %v78 = vadd.f32 %v77, 0.0036580483
    %v79 = vmul.f32 %v74, %v78
    %v80 = vadd.f32 %v79, 0.05243302
    %v81 = vmul.f32 %v74, %v80
    %v82 = vadd.f32 %v81, 0.18741608
    %v83 = vmul.f32 %v74, %v82
    %v84 = vadd.f32 %v83, 1.1283791
    %v85 = vmul.f32 %v71, %v84
    %v86 = vmul.f32 %v74, 3.8918573e-05
    %v87 = vadd.f32 %v86, 0.001143296
    %v88 = vmul.f32 %v74, %v87
    %v89 = vadd.f32 %v88, 0.014752088
    %v90 = vmul.f32 %v74, %v89
    %v91 = vadd.f32 %v90, 0.112945676
    %v92 = vmul.f32 %v74, %v91
    %v93 = vadd.f32 %v92, 0.4994258
    %v94 = vmul.f32 %v74, %v93
    %v95 = vadd.f32 %v94, 1.0
    %v96 = vrcp.pop %v95
    %v97 = vmul.f32 %v95, %v96
    %v98 = vsub.f32 1.0, %v97
    %v99 = vmul.f32 %v96, %v98
    %v100 = vadd.f32 %v96, %v99
    %vm101 = vweird.f32 %v95
    %vm102 = vweird.f32 %v96
    %vm103 = vmor %vm101, %vm102
    %v104 = vsel %vm103, %v96, %v100
    %v105 = vand.u32 2147483647, %v95
    %vm106 = vcmp.eq.f32.partialorder %v105, 8.507059e+37
    %v107 = vand.u32 %v95, 2147483648
    %v108 = vor.u32 1.1754944e-38, %v107
    %v109 = vsel %vm106, %v108, %v104
    %v110 = vmul.f32 %v85, %v109
    %v111 = vmin.f32 %v110, 1.0
    %v112 = vmax.f32 %v111, -1.0
    %v113 = vmul.f32 %v72, %v72
    %v114 = vmin.f32 16.0, %v113
    %v115 = vmul.f32 %v114, 2.1237322e-06
    %v116 = vadd.f32 %v115, 0.00028619796
    %v117 = vmul.f32 %v114, %v116
    %v118 = vadd.f32 %v117, 0.0036580483
    %v119 = vmul.f32 %v114, %v118
    %v120 = vadd.f32 %v119, 0.05243302
    %v121 = vmul.f32 %v114, %v120
    %v122 = vadd.f32 %v121, 0.18741608
    %v123 = vmul.f32 %v114, %v122
    %v124 = vadd.f32 %v123, 1.1283791
    %v125 = vmul.f32 %v72, %v124
    %v126 = vmul.f32 %v114, 3.8918573e-05
    %v127 = vadd.f32 %v126, 0.001143296
    %v128 = vmul.f32 %v114, %v127
    %v129 = vadd.f32 %v128, 0.014752088
    %v130 = vmul.f32 %v114, %v129
    %v131 = vadd.f32 %v130, 0.112945676
    %v132 = vmul.f32 %v114, %v131
    %v133 = vadd.f32 %v132, 0.4994258
    %v134 = vmul.f32 %v114, %v133
    %v135 = vadd.f32 %v134, 1.0
    %v136 = vrcp.pop %v135
    %v137 = vmul.f32 %v135, %v136
    %v138 = vsub.f32 1.0, %v137
    %v139 = vmul.f32 %v136, %v138
    %v140 = vadd.f32 %v136, %v139
    %vm141 = vweird.f32 %v135
    %vm142 = vweird.f32 %v136
    %vm143 = vmor %vm141, %vm142
    %v144 = vsel %vm143, %v136, %v140
    %v145 = vand.u32 2147483647, %v135
    %vm146 = vcmp.eq.f32.partialorder %v145, 8.507059e+37
    %v147 = vand.u32 %v135, 2147483648
    %v148 = vor.u32 1.1754944e-38, %v147
    %v149 = vsel %vm146, %v148, %v144
    %v150 = vmul.f32 %v125, %v149
    %v151 = vmin.f32 %v150, 1.0
    %v152 = vmax.f32 %v151, -1.0
    %v153 = vadd.f32 %v112, 1.0
    %v154 = vadd.f32 %v152, 1.0
    %v155 = vmul.f32 %v69, %v153
    %v156 = vmul.f32 %v70, %v154
    %v157 = vpack.c.bf16 %v156, %v155
    %v158 = vld [vmem:[%s3] sm:$0xf]
    %v159 = vld [vmem:[%s3 + $0x4] sm:$0xf]
    %v160 = vld [vmem:[%s3 + $0x8] sm:$0xf]
    %v161 = vld [vmem:[%s3 + $0xc] sm:$0xf]
    %v162 = vld [vmem:[%s3 + $0x10] sm:$0xf]
    %v163 = vld [vmem:[%s3 + $0x14] sm:$0xf]
    %v164 = vld [vmem:[%s3 + $0x18] sm:$0xf]
    %v165 = vld [vmem:[%s3 + $0x1c] sm:$0xf]
    %v166 = vld [vmem:[%s3 + $0x20] sm:$0xf]
    %v167 = vld [vmem:[%s3 + $0x24] sm:$0xf]
    %v168 = vld [vmem:[%s3 + $0x28] sm:$0xf]
    %v169 = vld [vmem:[%s3 + $0x2c] sm:$0xf]
    %v170 = vld [vmem:[%s3 + $0x30] sm:$0xf]
    %v171 = vld [vmem:[%s3 + $0x34] sm:$0xf]
    %v172 = vld [vmem:[%s3 + $0x38] sm:$0xf]
    %v173 = vld [vmem:[%s3 + $0x3c] sm:$0xf]
    %v174 = vld [vmem:[%s4] sm:$0x1]
    %v176 = vperm.slane %v174, 0
    %v194 = vunpack.c.l.b16 %v158
    %v195 = vunpack.c.l.b16 %v159
    %v196 = vunpack.c.l.b16 %v160
    %v197 = vunpack.c.l.b16 %v161
    %v198 = vunpack.c.l.b16 %v162
    %v199 = vunpack.c.l.b16 %v163
    %v200 = vunpack.c.l.b16 %v164
    %v201 = vunpack.c.l.b16 %v165
    %v202 = vunpack.c.l.b16 %v166
    %v203 = vunpack.c.l.b16 %v167
    %v204 = vunpack.c.l.b16 %v168
    %v205 = vunpack.c.l.b16 %v169
    %v206 = vunpack.c.l.b16 %v170
    %v207 = vunpack.c.l.b16 %v171
    %v208 = vunpack.c.l.b16 %v172
    %v209 = vunpack.c.l.b16 %v173
    %v210 = vpack.c.b16 %v195, %v194
    %v211 = vpack.c.b16 %v197, %v196
    %v212 = vpack.c.b16 %v199, %v198
    %v213 = vpack.c.b16 %v201, %v200
    %v214 = vpack.c.b16 %v203, %v202
    %v215 = vpack.c.b16 %v205, %v204
    %v216 = vpack.c.b16 %v207, %v206
    %v217 = vpack.c.b16 %v209, %v208
    %226 = vmatpush.bf16.msra.mxu0 %v217
    %227 = vmatpush.bf16.msra.mxu0 %v216
    %228 = vmatpush.bf16.msra.mxu0 %v215
    %229 = vmatpush.bf16.msra.mxu0 %v214
    %230 = vmatpush.bf16.msra.mxu0 %v213
    %231 = vmatpush.bf16.msra.mxu0 %v212
    %232 = vmatpush.bf16.msra.mxu0 %v211
    %233 = vmatpush.bf16.msra.mxu0 %v210
    %234 = vmatmul.bf16.gmra.mxu0 %v157
    %v235 = vpop.f32.mrf.mxu0
    %v236 = vadd.f32 %v176, %v235
    %v237 = vpop.f32.mrf.mxu0
    %v238 = vadd.f32 %v176, %v237
    %239 = vdwg.mxu0
    %v240 = vadd.f32 %v236, %v28
    %v241 = vadd.f32 %v238, %v29
    %v242 = vsel %vm51, %v240, 0.0
    %243 = vadd.xlane.f32.xlu0 %v242
    %v244 = vpop.xlane.xlu0 %243
    %v245 = vsel %vm51, %v241, 0.0
    %246 = vadd.xlane.f32.xlu0 %v245
    %v247 = vpop.xlane.xlu0 %246
    %v248 = vrcp.pop 32.0
    %v249 = vmul.f32 32.0, %v248
    %v250 = vsub.f32 1.0, %v249
    %v251 = vmul.f32 %v248, %v250
    %v252 = vadd.f32 %v248, %v251
    %vm253 = vweird.f32 %v248
    %v254 = vsel %vm253, %v248, %v252
    %v255 = vmul.f32 %v244, %v254
    %v256 = vmul.f32 %v247, %v254
    %v257 = vsub.f32 %v240, %v255
    %v258 = vsub.f32 %v241, %v256
    %v259 = vmul.f32 %v257, %v257
    %v260 = vmul.f32 %v258, %v258
    %v261 = vsel %vm51, %v259, 0.0
    %262 = vadd.xlane.f32.xlu0 %v261
    %v263 = vpop.xlane.xlu0 %262
    %v264 = vsel %vm51, %v260, 0.0
    %265 = vadd.xlane.f32.xlu0 %v264
    %v266 = vpop.xlane.xlu0 %265
    %v267 = vmul.f32 %v263, %v254
    %v268 = vmul.f32 %v266, %v254
    %v269 = vadd.f32 %v267, 1e-05
    %v270 = vadd.f32 %v268, 1e-05
    %v271 = vrsqrt.pop %v269
    %v272 = vmul.f32 %v271, %v269
    %v273 = vmul.f32 %v272, %v271
    %v274 = vmul.f32 0.5, %v273
    %v275 = vsub.f32 1.5, %v274
    %v276 = vmul.f32 %v271, %v275
    %vm277 = vweird.f32 %v269
    %vm278 = vweird.f32 %v271
    %vm279 = vmor %vm277, %vm278
    %v280 = vsel %vm279, %v271, %v276
    %v281 = vrsqrt.pop %v270
    %v282 = vmul.f32 %v281, %v270
    %v283 = vmul.f32 %v282, %v281
    %v284 = vmul.f32 0.5, %v283
    %v285 = vsub.f32 1.5, %v284
    %v286 = vmul.f32 %v281, %v285
    %vm287 = vweird.f32 %v270
    %vm288 = vweird.f32 %v281
    %vm289 = vmor %vm287, %vm288
    %v290 = vsel %vm289, %v281, %v286
    %v291 = vmul.f32 %v257, %v280
    %v292 = vmul.f32 %v258, %v290
    %v293 = vld [vmem:[%s5] sm:$0x1]
    %v295 = vperm.slane %v293, 0
    %v297 = vmul.f32 %v291, %v295
    %v298 = vmul.f32 %v292, %v295
    %v299 = vld [vmem:[%s6] sm:$0x1]
    %v301 = vperm.slane %v299, 0
    %v303 = vadd.f32 %v297, %v301
    %v304 = vadd.f32 %v298, %v301
    %305 = vst.msk [vmem:[#allocation2] sm:$0xff] %vm51, %v303
    %306 = vst.msk [vmem:[#allocation2 + $0x8] sm:$0xff] %vm51, %v304
    // Predicated region
    $region30: #{tpu_custom_call.1} parent=1 // pred_check
      _
    $region31: #{tpu_custom_call.1} parent=1 // pred_check_branch
      %308 = sbr.rel (0) target = $region33
    $region32: #{tpu_custom_call.1} parent=1 // pred_region
      %310 = vsyncadd [#allocation3], 0
      %s311 = sshll.u32 [#allocation2], 4
      %s312 = int_to_ptr.vmem [resolvable:$true] %s311
      %s313 = sshll.u32 %s7, 4
      %s314 = int_to_ptr.hbm [resolvable:$true] %s313
      %319 = dma.vmem_to_hbm [thread:$0]  %s312, 256, %s314, [#allocation3], 128, 128, 8
    $region33: #{tpu_custom_call.1} parent=1 // pred_fallthru
      _
    // Predicated region
    $region34: #{tpu_custom_call.1} parent=1 // pred_check
      _
    $region35: #{tpu_custom_call.1} parent=1 // pred_check_branch
      %321 = sbr.rel (0) target = $region37
    $region36: #{tpu_custom_call.1} parent=1 // pred_region
      %323 = dma.done [#allocation3], 256
    $region37: #{tpu_custom_call.1} parent=1 // pred_fallthru
      _
    %324 = vsyncpa [#allocation3], 1

</llo_original>
